<compile_context>
chip_gen: v6e
topology: v6e:2x2x1
jax: 0.10.0
libtpu: 0.0.40
codegen_flags: <defaults>
</compile_context>

<pallas_src>
import functools

import jax
import jax.numpy as jnp
import numpy as np
from jax import lax
from jax.experimental import pallas as pl
from jax.experimental.pallas import tpu as pltpu


def _round_up(x, m):
    return -(-x // m) * m


# ----------------------------------------------------------------------------
# Pallas kernels
# ----------------------------------------------------------------------------
def _conv_gemm_resident_kernel(w_ref, b_ref, p_ref, o_ref):
    # w_ref: (CKKp, M) bf16, VMEM-resident (constant index_map, Buffered(1))
    # b_ref: (1, M) f32      p_ref: (TM, CKKp) bf16      o_ref: (TM, M) bf16
    acc = jnp.dot(p_ref[...], w_ref[...], preferred_element_type=jnp.float32)
    o_ref[...] = (acc + b_ref[...]).astype(o_ref.dtype)


def _conv_gemm_ktiled_kernel(w_ref, b_ref, p_ref, o_ref, acc_ref):
    # Fallback for configs whose full weight does not fit the VMEM budget.
    # Grid: (row_tiles [parallel], k_tiles [arbitrary]); f32 accumulator.
    k = pl.program_id(1)

    @pl.when(k == 0)
    def _():
        acc_ref[...] = jnp.zeros_like(acc_ref)

    acc_ref[...] += jnp.dot(p_ref[...], w_ref[...],
                            preferred_element_type=jnp.float32)

    @pl.when(k == pl.num_programs(1) - 1)
    def _():
        o_ref[...] = (acc_ref[...] + b_ref[...]).astype(o_ref.dtype)


def _squash_kernel(u_ref, o_ref):
    # u_ref: (TB, D, R) bf16 -- capsule dim D on sublanes, routes R on lanes.
    # o_ref: (TB, D, R) f32
    u = u_ref[...].astype(jnp.float32)
    sq = jnp.sum(u * u, axis=1, keepdims=True)                    # (TB, 1, R)
    # torch: sq * u / ((1 + sq) * sqrt(sq)) == u * sqrt(sq) / (1 + sq)
    # (no epsilon: an exactly-zero capsule vector yields NaN, as in PyTorch).
    scale = jnp.sqrt(sq) * pl.reciprocal(1.0 + sq, approx=True)
    o_ref[...] = (u * scale).astype(o_ref.dtype)


# ----------------------------------------------------------------------------
# JAX glue
# ----------------------------------------------------------------------------
def _extract_patches(x, kernel_size, stride):
    """x: (B, C, H, W) -> patches (B*OH*OW, C*K*K); feature order (c, kh, kw)."""
    B, C, H, W = x.shape
    K = kernel_size
    OH = (H - K) // stride + 1
    OW = (W - K) // stride + 1
    cols = []
    for kh in range(K):
        for kw in range(K):
            cols.append(
                x[:, :, kh:kh + stride * OH:stride, kw:kw + stride * OW:stride])
    p = jnp.stack(cols, axis=2)                      # (B, C, K*K, OH, OW)
    p = p.reshape(B, C * K * K, OH * OW)             # (B, CKK, S)
    p = jnp.transpose(p, (0, 2, 1))                  # (B, S, CKK)
    return p.reshape(B * OH * OW, C * K * K), OH, OW


_VMEM_LIMIT = 48 * 1024 * 1024        # scoped VMEM ceiling (OK on v5e/v6e/v7x)
_RESIDENT_BUDGET = 40 * 1024 * 1024   # weight + double-buffered blocks budget


def _choose_tk(ckk_pad, max_tk):
    """Largest multiple of 128 that divides ckk_pad and is <= max_tk."""
    best = 128
    t = 128
    while t <= max_tk:
        if ckk_pad % t == 0:
            best = t
        t += 128
    return best


def _choose_tb(batch, per_sample_bytes):
    """Batch tile for squash: a divisor of B, a few MB per block, >=2 tiles."""
    cap = max(1, (2 << 20) // max(1, per_sample_bytes))
    tb = 1
    for d in range(1, batch + 1):
        if batch % d == 0 and d <= cap:
            tb = d
    if tb == batch and batch > 1 and batch % 2 == 0:
        tb = batch // 2          # expose >=2 "parallel" tiles (v7x has 2 TCs)
    return tb


@functools.partial(jax.jit, static_argnames=(
    "kernel_size", "stride", "num_routes", "force_ktiled", "max_tk"))
def primary_caps_forward(x, weight, bias, *, kernel_size, stride, num_routes,
                         force_ktiled=False, max_tk=4096):
    """
    x:      (B, C, H, W)  float32 NCHW
    weight: (num_caps, out_ch, C, K, K)
    bias:   (num_caps, out_ch)
    returns (B, num_routes, D) squashed capsule outputs (float32).
    """
    B, C, H, W = x.shape
    num_caps, out_ch = weight.shape[0], weight.shape[1]
    K = kernel_size
    M = num_caps * out_ch
    CKK = C * K * K

    # im2col in bf16 (cast first -> halves HBM traffic of the big intermediate).
    patches, OH, OW = _extract_patches(x.astype(jnp.bfloat16), K, stride)
    S = OH * OW
    rows = B * S

    TM = 256 if rows >= 256 else 128
    rows_pad = _round_up(rows, TM)
    row_tiles = rows_pad // TM
    ckk_pad = _round_up(CKK, 128)     # no-op for real PrimaryCaps (768*81)

    # Weight -> (CKK, M) bf16: columns (cap, out_ch), rows (c, kh, kw).
    w_mat = jnp.transpose(weight.astype(jnp.bfloat16).reshape(M, CKK), (1, 0))
    w_mat = jnp.pad(w_mat, ((0, ckk_pad - CKK), (0, 0)))
    p_mat = jnp.pad(patches, ((0, rows_pad - rows), (0, ckk_pad - CKK)))
    b_mat = bias.reshape(1, M).astype(jnp.float32)

    # VMEM plan: resident weight (fetched once) when it fits, else K-tiled.
    resident_bytes = (ckk_pad * M * 2          # weight, single-buffered
                      + 2 * TM * ckk_pad * 2   # patches, double-buffered
                      + 2 * TM * M * 2)        # output, double-buffered
    use_resident = (not force_ktiled) and resident_bytes <= _RESIDENT_BUDGET

    if use_resident:
        conv_out = pl.pallas_call(
            _conv_gemm_resident_kernel,
            out_shape=jax.ShapeDtypeStruct((rows_pad, M), jnp.bfloat16),
            grid=(row_tiles,),
            in_specs=[
                pl.BlockSpec((ckk_pad, M), lambda r: (0, 0),
                             pipeline_mode=pl.Buffered(1)),   # resident weight
                pl.BlockSpec((1, M), lambda r: (0, 0)),       # bias
                pl.BlockSpec((TM, ckk_pad), lambda r: (r, 0)),  # patches
            ],
            out_specs=pl.BlockSpec((TM, M), lambda r: (r, 0)),
            compiler_params=pltpu.CompilerParams(
                dimension_semantics=("parallel",),
                vmem_limit_bytes=_VMEM_LIMIT),
        )(w_mat, b_mat, p_mat)
    else:
        TK = _choose_tk(ckk_pad, max_tk)
        k_tiles = ckk_pad // TK
        conv_out = pl.pallas_call(
            _conv_gemm_ktiled_kernel,
            out_shape=jax.ShapeDtypeStruct((rows_pad, M), jnp.bfloat16),
            grid=(row_tiles, k_tiles),
            in_specs=[
                pl.BlockSpec((TK, M), lambda r, k: (k, 0)),     # weight K-tiled
                pl.BlockSpec((1, M), lambda r, k: (0, 0)),      # bias
                pl.BlockSpec((TM, TK), lambda r, k: (r, k)),    # patches
            ],
            out_specs=pl.BlockSpec((TM, M), lambda r, k: (r, 0)),
            scratch_shapes=[pltpu.VMEM((TM, M), jnp.float32)],
            compiler_params=pltpu.CompilerParams(
                dimension_semantics=("parallel", "arbitrary"),
                vmem_limit_bytes=_VMEM_LIMIT),
        )(w_mat, b_mat, p_mat)

    # (rows, M) -> (B, M, S): flat order now matches torch.stack(u, dim=1), so
    # .view(B, num_routes, -1) is a plain reshape.  Stays bf16 until squash.
    conv = conv_out[:rows].reshape(B, S, M)
    conv = jnp.transpose(conv, (0, 2, 1))              # (B, M, S)
    total = M * S
    assert total % num_routes == 0, "num_routes must divide num_caps*out_ch*OH*OW"
    D = total // num_routes
    u = conv.reshape(B, num_routes, D)

    # squash: routes lane-dense, reduce D on sublanes, tiled + parallel over B.
    u_t = jnp.transpose(u, (0, 2, 1))                  # (B, D, R) bf16
    TB = _choose_tb(B, D * num_routes * 4)
    out_t = pl.pallas_call(
        _squash_kernel,
        out_shape=jax.ShapeDtypeStruct((B, D, num_routes), jnp.float32),
        grid=(B // TB,),
        in_specs=[pl.BlockSpec((TB, D, num_routes), lambda b: (b, 0, 0))],
        out_specs=pl.BlockSpec((TB, D, num_routes), lambda b: (b, 0, 0)),
        compiler_params=pltpu.CompilerParams(
            dimension_semantics=("parallel",)),
    )(u_t)
    return jnp.transpose(out_t, (0, 2, 1))             # (B, num_routes, D)


# ----------------------------------------------------------------------------
# Pure-JAX reference (mirrors the PyTorch module semantics)
# ----------------------------------------------------------------------------
def primary_caps_reference(x, weight, bias, *, kernel_size, stride, num_routes):
    B = x.shape[0]
    num_caps = weight.shape[0]
    outs = []
    for i in range(num_caps):
        y = lax.conv_general_dilated(
            x, weight[i], window_strides=(stride, stride), padding="VALID",
            dimension_numbers=("NCHW", "OIHW", "NCHW"))
        y = y + bias[i][None, :, None, None]
        outs.append(y)
    u = jnp.stack(outs, axis=1)                  # (B, caps, out_ch, OH, OW)
    u = u.reshape(B, num_routes, -1)
    sq = jnp.sum(u * u, axis=-1, keepdims=True)
    return sq * u / ((1.0 + sq) * jnp.sqrt(sq))


# ----------------------------------------------------------------------------
if __name__ == "__main__":
    # Config 1 (default, resident-weight GEMM path): scaled-down PrimaryCaps.
    #   input (2, 4, 16, 16), 8 capsules, Conv2d(4 -> 16, k=3, s=2, p=0)
    #   -> per-capsule (2, 16, 7, 7); D = 8, num_routes = 784.
    B, C, H, W = 2, 4, 16, 16
    num_capsules, out_channels, kernel_size, stride = 8, 16, 3, 2
    OH = OW = (H - kernel_size) // stride + 1
    D = 8
    num_routes = (num_capsules * out_channels * OH * OW) // D

    key = jax.random.PRNGKey(0)
    kx, kw, kb = jax.random.split(key, 3)
    x = jax.random.normal(kx, (B, C, H, W), dtype=jnp.float32)
    fan_in = C * kernel_size * kernel_size
    weight = jax.random.normal(
        kw, (num_capsules, out_channels, C, kernel_size, kernel_size),
        dtype=jnp.float32) * (1.0 / np.sqrt(fan_in))
    bias = jax.random.normal(kb, (num_capsules, out_channels),
                             dtype=jnp.float32) * 0.05

    out = primary_caps_forward(
        x, weight, bias,
        kernel_size=kernel_size, stride=stride, num_routes=num_routes)
    out = jax.block_until_ready(out)
    ref = primary_caps_reference(
        x, weight, bias,
        kernel_size=kernel_size, stride=stride, num_routes=num_routes)
    np.testing.assert_allclose(np.asarray(out), np.asarray(ref),
                               rtol=2e-2, atol=2e-2)

    # Config 2: exercise the K-tiled fallback path (big-CKK configs).
    B2, C2, H2, W2 = 2, 16, 12, 12
    k2, s2 = 3, 2
    OH2 = OW2 = (H2 - k2) // s2 + 1
    nr2 = (num_capsules * out_channels * OH2 * OW2) // D
    kx2, kw2, kb2 = jax.random.split(jax.random.PRNGKey(1), 3)
    x2 = jax.random.normal(kx2, (B2, C2, H2, W2), dtype=jnp.float32)
    w2 = jax.random.normal(
        kw2, (num_capsules, out_channels, C2, k2, k2),
        dtype=jnp.float32) * (1.0 / np.sqrt(C2 * k2 * k2))
    b2 = jax.random.normal(kb2, (num_capsules, out_channels),
                           dtype=jnp.float32) * 0.05
    out2 = primary_caps_forward(
        x2, w2, b2, kernel_size=k2, stride=s2, num_routes=nr2,
        force_ktiled=True, max_tk=128)
    out2 = jax.block_until_ready(out2)
    ref2 = primary_caps_reference(
        x2, w2, b2, kernel_size=k2, stride=s2, num_routes=nr2)
    np.testing.assert_allclose(np.asarray(out2), np.asarray(ref2),
                               rtol=2e-2, atol=2e-2)

    print("KERNEL_OK")
</pallas_src>

<mosaic_0001>
module attributes {stable_mosaic.version = 11 : i64} {
  func.func @_conv_gemm_resident_kernel(%arg0: i32, %arg1: memref<128x128xbf16, #tpu.memory_space<vmem>>, %arg2: memref<1x128xf32, #tpu.memory_space<vmem>>, %arg3: memref<128x128xbf16, #tpu.memory_space<vmem>>, %arg4: memref<128x128xbf16, #tpu.memory_space<vmem>>) attributes {dimension_semantics = [#tpu.dimension_semantics<parallel>], iteration_bounds = array<i64: 1>, scalar_prefetch = 0 : i64, scratch_operands = 0 : i64, tpu.core_type = #tpu.core_type<tc>, window_params = [{pipeline_mode = #tpu.pipeline_mode<synchronous>, transform_indices = @transform_0, window_bounds = array<i64: 128, 128>}, {pipeline_mode = #tpu.pipeline_mode<synchronous>, transform_indices = @transform_1, window_bounds = array<i64: 1, 128>}, {transform_indices = @transform_2, window_bounds = array<i64: 128, 128>}, {transform_indices = @transform_3, window_bounds = array<i64: 128, 128>}]} {
    %c0 = arith.constant 0 : index
    %c0_0 = arith.constant 0 : index
    %0 = vector.load %arg3[%c0, %c0_0] : memref<128x128xbf16, #tpu.memory_space<vmem>>, vector<128x128xbf16>
    %c0_1 = arith.constant 0 : index
    %c0_2 = arith.constant 0 : index
    %1 = vector.load %arg1[%c0_1, %c0_2] : memref<128x128xbf16, #tpu.memory_space<vmem>>, vector<128x128xbf16>
    %cst = arith.constant dense<0.000000e+00> : vector<128x128xf32>
    %2 = tpu.matmul %0, %1, %cst {dimension_numbers = #tpu.dot_dimension_numbers<[1], [0], [0], [1], [0, 0, 1, 1], [], []>} : vector<128x128xbf16>, vector<128x128xbf16>, vector<128x128xf32> -> vector<128x128xf32>
    %c0_3 = arith.constant 0 : index
    %c0_4 = arith.constant 0 : index
    %3 = vector.load %arg2[%c0_3, %c0_4] : memref<1x128xf32, #tpu.memory_space<vmem>>, vector<1x128xf32>
    %4 = vector.broadcast %3 : vector<1x128xf32> to vector<128x128xf32>
    %5 = arith.addf %2, %4 : vector<128x128xf32>
    %6 = arith.truncf %5 : vector<128x128xf32> to vector<128x128xbf16>
    %c0_5 = arith.constant 0 : index
    %c0_6 = arith.constant 0 : index
    %7 = vector.load %arg4[%c0_5, %c0_6] : memref<128x128xbf16, #tpu.memory_space<vmem>>, vector<128x128xbf16>
    tpu.vector_store %arg4[%c0_5, %c0_6], %6 {strides = array<i32>} : memref<128x128xbf16, #tpu.memory_space<vmem>>, vector<128x128xbf16>,
    return
  }
  func.func @transform_0(%arg0: i32) -> (i32, i32) {
    %c0_i32 = arith.constant 0 : i32
    %c0_i32_0 = arith.constant 0 : i32
    %c0_i32_1 = arith.constant 0 : i32
    return %c0_i32, %c0_i32_0 : i32, i32
  }
  func.func @transform_1(%arg0: i32) -> (i32, i32) {
    %c0_i32 = arith.constant 0 : i32
    %c0_i32_0 = arith.constant 0 : i32
    %c0_i32_1 = arith.constant 0 : i32
    return %c0_i32, %c0_i32_0 : i32, i32
  }
  func.func @transform_2(%arg0: i32) -> (i32, i32) {
    %c0_i32 = arith.constant 0 : i32
    %c0_i32_0 = arith.constant 0 : i32
    return %arg0, %c0_i32 : i32, i32
  }
  func.func @transform_3(%arg0: i32) -> (i32, i32) {
    %c0_i32 = arith.constant 0 : i32
    %c0_i32_0 = arith.constant 0 : i32
    return %arg0, %c0_i32 : i32, i32
  }
}

module attributes {stable_mosaic.version = 11 : i64} {
  func.func @_squash_kernel(%arg0: i32, %arg1: memref<1x8x784xbf16, #tpu.memory_space<vmem>>, %arg2: memref<1x8x784xf32, #tpu.memory_space<vmem>>) attributes {dimension_semantics = [#tpu.dimension_semantics<parallel>], iteration_bounds = array<i64: 2>, scalar_prefetch = 0 : i64, scratch_operands = 0 : i64, tpu.core_type = #tpu.core_type<tc>, window_params = [{transform_indices = @transform_0, window_bounds = array<i64: 1, 8, 784>}, {transform_indices = @transform_1, window_bounds = array<i64: 1, 8, 784>}]} {
    %c0 = arith.constant 0 : index
    %c0_0 = arith.constant 0 : index
    %c0_1 = arith.constant 0 : index
    %0 = vector.load %arg1[%c0, %c0_0, %c0_1] : memref<1x8x784xbf16, #tpu.memory_space<vmem>>, vector<1x8x784xbf16>
    %1 = arith.extf %0 : vector<1x8x784xbf16> to vector<1x8x784xf32>
    %2 = arith.mulf %1, %1 : vector<1x8x784xf32>
    %cst = arith.constant dense<0.000000e+00> : vector<1x784xf32>
    %3 = vector.multi_reduction <add>, %2, %cst [1] : vector<1x8x784xf32> to vector<1x784xf32>
    %4 = vector.shape_cast %3 : vector<1x784xf32> to vector<1x1x784xf32>
    %5 = math.sqrt %4 : vector<1x1x784xf32>
    %cst_2 = arith.constant 1.000000e+00 : f32
    %6 = vector.broadcast %cst_2 : f32 to vector<1x1x784xf32>
    %7 = arith.addf %6, %4 : vector<1x1x784xf32>
    %8 = tpu.reciprocal %7 {approx = true} : vector<1x1x784xf32> -> vector<1x1x784xf32>
    %9 = arith.mulf %5, %8 : vector<1x1x784xf32>
    %10 = vector.broadcast %9 : vector<1x1x784xf32> to vector<1x8x784xf32>
    %11 = arith.mulf %1, %10 : vector<1x8x784xf32>
    %c0_3 = arith.constant 0 : index
    %c0_4 = arith.constant 0 : index
    %c0_5 = arith.constant 0 : index
    %12 = vector.load %arg2[%c0_3, %c0_4, %c0_5] : memref<1x8x784xf32, #tpu.memory_space<vmem>>, vector<1x8x784xf32>
    tpu.vector_store %arg2[%c0_3, %c0_4, %c0_5], %11 {strides = array<i32>} : memref<1x8x784xf32, #tpu.memory_space<vmem>>, vector<1x8x784xf32>,
    return
  }
  func.func @transform_0(%arg0: i32) -> (i32, i32, i32) {
    %c0_i32 = arith.constant 0 : i32
    %c0_i32_0 = arith.constant 0 : i32
    %c0_i32_1 = arith.constant 0 : i32
    return %arg0, %c0_i32, %c0_i32_0 : i32, i32, i32
  }
  func.func @transform_1(%arg0: i32) -> (i32, i32, i32) {
    %c0_i32 = arith.constant 0 : i32
    %c0_i32_0 = arith.constant 0 : i32
    %c0_i32_1 = arith.constant 0 : i32
    return %arg0, %c0_i32, %c0_i32_0 : i32, i32, i32
  }
}

</mosaic_0001>

<llo_original>
// kernel: primary_caps_forward.2
$region0: #{primary_caps_forward.2}
  #allocation0 [shape = 'u32[]', space=smem, size = 0x4, offset = 0x4, fixed_abs, tag = 'smem constant byte address 0x4 - core index']
  #allocation1 [shape = 'u32[144,128]{1,0:T(1,128)}', space=vmem, size = 0x12000, scoped, tag = 'internal scratch']
  %s0 = inlined_call_operand.vmem [shape: bf16[128,128], index: 0, kind: input, shape index: {}]
  %s1 = inlined_call_operand.vmem [shape: f32[1,128], index: 1, kind: input, shape index: {}]
  %s2 = inlined_call_operand.vmem [shape: bf16[128,128], index: 2, kind: input, shape index: {}]
  %s3 = inlined_call_operand.vmem [shape: bf16[128,128], index: 3, kind: output, shape index: {}]
  %s4 = sld [smem:[#allocation0]]
  $region22: #{primary_caps_forward.2} parent=0
    _
  %s6 = ssub.s32 1, %s4
  %s7 = scalar_select 0, %s6, %s4
  // Predicated region
  $region2: #{primary_caps_forward.2} parent=0 // pred_check
    _
  $region3: #{primary_caps_forward.2} parent=0 // pred_check_branch
    %9 = sbr.rel (0) target = $region5
  $region4: #{primary_caps_forward.2} parent=0 // pred_region
    _
  $region5: #{primary_caps_forward.2} parent=0 // pred_fallthru
    _
  // Predicated region
  $region6: #{primary_caps_forward.2} parent=0 // pred_check
    _
  $region7: #{primary_caps_forward.2} parent=0 // pred_check_branch
    %11 = sbr.rel (0) target = $region9
  $region8: #{primary_caps_forward.2} parent=0 // pred_region
    _
  $region9: #{primary_caps_forward.2} parent=0 // pred_fallthru
    _
  // Predicated region
  $region10: #{primary_caps_forward.2} parent=0 // pred_check
    _
  $region11: #{primary_caps_forward.2} parent=0 // pred_check_branch
    %13 = sbr.rel (0) target = $region13
  $region12: #{primary_caps_forward.2} parent=0 // pred_region
    _
  $region13: #{primary_caps_forward.2} parent=0 // pred_fallthru
    _
  %v15 = vld [vmem:[%s2] sm:$0xf]
  %v16 = vld [vmem:[%s2 + $0x4] sm:$0xf]
  %v17 = vld [vmem:[%s2 + $0x8] sm:$0xf]
  %v18 = vld [vmem:[%s2 + $0xc] sm:$0xf]
  %v19 = vld [vmem:[%s2 + $0x10] sm:$0xf]
  %v20 = vld [vmem:[%s2 + $0x14] sm:$0xf]
  %v21 = vld [vmem:[%s2 + $0x18] sm:$0xf]
  %v22 = vld [vmem:[%s2 + $0x1c] sm:$0xf]
  %v23 = vld [vmem:[%s2 + $0x20] sm:$0xf]
  %v24 = vld [vmem:[%s2 + $0x24] sm:$0xf]
  %v25 = vld [vmem:[%s2 + $0x28] sm:$0xf]
  %v26 = vld [vmem:[%s2 + $0x2c] sm:$0xf]
  %v27 = vld [vmem:[%s2 + $0x30] sm:$0xf]
  %v28 = vld [vmem:[%s2 + $0x34] sm:$0xf]
  %v29 = vld [vmem:[%s2 + $0x38] sm:$0xf]
  %v30 = vld [vmem:[%s2 + $0x3c] sm:$0xf]
  %v31 = vld [vmem:[%s0] sm:$0xf]
  %v32 = vld [vmem:[%s0 + $0x4] sm:$0xf]
  %v33 = vld [vmem:[%s0 + $0x8] sm:$0xf]
  %v34 = vld [vmem:[%s0 + $0xc] sm:$0xf]
  %v35 = vld [vmem:[%s0 + $0x10] sm:$0xf]
  %v36 = vld [vmem:[%s0 + $0x14] sm:$0xf]
  %v37 = vld [vmem:[%s0 + $0x18] sm:$0xf]
  %v38 = vld [vmem:[%s0 + $0x1c] sm:$0xf]
  %v39 = vld [vmem:[%s0 + $0x20] sm:$0xf]
  %v40 = vld [vmem:[%s0 + $0x24] sm:$0xf]
  %v41 = vld [vmem:[%s0 + $0x28] sm:$0xf]
  %v42 = vld [vmem:[%s0 + $0x2c] sm:$0xf]
  %v43 = vld [vmem:[%s0 + $0x30] sm:$0xf]
  %v44 = vld [vmem:[%s0 + $0x34] sm:$0xf]
  %v45 = vld [vmem:[%s0 + $0x38] sm:$0xf]
  %v46 = vld [vmem:[%s0 + $0x3c] sm:$0xf]
  %v47 = vld [vmem:[%s1] sm:$0x1]
  %v49 = vlaneseq
  %v50 = vshrl.u32 %v49, 7
  %v51 = vsub.s32 0, %v50
  %v52 = vrot.slane %v47, %v51
  %v70 = vunpack.c.l.b16 %v15
  %v71 = vunpack.c.l.b16 %v16
  %v72 = vunpack.c.l.b16 %v17
  %v73 = vunpack.c.l.b16 %v18
  %v74 = vunpack.c.l.b16 %v19
  %v75 = vunpack.c.l.b16 %v20
  %v76 = vunpack.c.l.b16 %v21
  %v77 = vunpack.c.l.b16 %v22
  %v78 = vunpack.c.l.b16 %v23
  %v79 = vunpack.c.l.b16 %v24
  %v80 = vunpack.c.l.b16 %v25
  %v81 = vunpack.c.l.b16 %v26
  %v82 = vunpack.c.l.b16 %v27
  %v83 = vunpack.c.l.b16 %v28
  %v84 = vunpack.c.l.b16 %v29
  %v85 = vunpack.c.l.b16 %v30
  %v86 = vpack.c.b16 %v71, %v70
  %v87 = vpack.c.b16 %v73, %v72
  %v88 = vpack.c.b16 %v75, %v74
  %v89 = vpack.c.b16 %v77, %v76
  %v90 = vpack.c.b16 %v79, %v78
  %v91 = vpack.c.b16 %v81, %v80
  %v92 = vpack.c.b16 %v83, %v82
  %v93 = vpack.c.b16 %v85, %v84
  %v118 = vunpack.c.l.b16 %v31
  %v119 = vunpack.c.l.b16 %v32
  %v120 = vunpack.c.l.b16 %v33
  %v121 = vunpack.c.l.b16 %v34
  %v122 = vunpack.c.l.b16 %v35
  %v123 = vunpack.c.l.b16 %v36
  %v124 = vunpack.c.l.b16 %v37
  %v125 = vunpack.c.l.b16 %v38
  %v126 = vunpack.c.l.b16 %v39
  %v127 = vunpack.c.l.b16 %v40
  %v128 = vunpack.c.l.b16 %v41
  %v129 = vunpack.c.l.b16 %v42
  %v130 = vunpack.c.l.b16 %v43
  %v131 = vunpack.c.l.b16 %v44
  %v132 = vunpack.c.l.b16 %v45
  %v133 = vunpack.c.l.b16 %v46
  %v134 = vpack.c.b16 %v119, %v118
  %v135 = vpack.c.b16 %v121, %v120
  %v136 = vpack.c.b16 %v123, %v122
  %v137 = vpack.c.b16 %v125, %v124
  %v138 = vpack.c.b16 %v127, %v126
  %v139 = vpack.c.b16 %v129, %v128
  %v140 = vpack.c.b16 %v131, %v130
  %v141 = vpack.c.b16 %v133, %v132
  %150 = vmatprep.subr.bf16.mxu0 0
  %151 = vmatpush1.bf16.msra.mxu0 %v141
  %152 = vmatprep.subr.bf16.mxu0 0
  %153 = vmatpush1.bf16.msra.mxu0 %v140
  %154 = vmatprep.subr.bf16.mxu0 0
  %155 = vmatpush1.bf16.msra.mxu0 %v139
  %156 = vmatprep.subr.bf16.mxu0 0
  %157 = vmatpush1.bf16.msra.mxu0 %v138
  %158 = vmatprep.subr.bf16.mxu0 0
  %159 = vmatpush1.bf16.msra.mxu0 %v137
  %160 = vmatprep.subr.bf16.mxu0 0
  %161 = vmatpush1.bf16.msra.mxu0 %v136
  %162 = vmatprep.subr.bf16.mxu0 0
  %163 = vmatpush1.bf16.msra.mxu0 %v135
  %164 = vmatprep.subr.bf16.mxu0 0
  %165 = vmatpush1.bf16.msra.mxu0 %v134
  %166 = vmatprep.subr.bf16.mxu0 0
  %167 = vmatpush2.bf16.msra.mxu0 0
  %168 = vmatprep.subr.bf16.mxu0 0
  %169 = vmatpush2.bf16.msra.mxu0 0
  %170 = vmatprep.subr.bf16.mxu0 0
  %171 = vmatpush2.bf16.msra.mxu0 0
  %172 = vmatprep.subr.bf16.mxu0 0
  %173 = vmatpush2.bf16.msra.mxu0 0
  %174 = vmatprep.subr.bf16.mxu0 0
  %175 = vmatpush2.bf16.msra.mxu0 0
  %176 = vmatprep.subr.bf16.mxu0 0
  %177 = vmatpush2.bf16.msra.mxu0 0
  %178 = vmatprep.subr.bf16.mxu0 0
  %179 = vmatpush2.bf16.msra.mxu0 0
  %180 = vmatprep.subr.bf16.mxu0 0
  %181 = vmatpush2.bf16.msra.mxu0 0
  %182 = vmatprep.mubr.bf16.mxu0 0
  %183 = vmatmul.mubr.bf16.gmra.mxu0 %v86
  %v184 = vpop.f32.mrf.mxu0
  %v185 = vadd.f32 %v52, %v184
  %v186 = vpop.f32.mrf.mxu0
  %v187 = vpop.f32.mrf.mxu0
  %v188 = vadd.f32 %v52, %v187
  %v189 = vpop.f32.mrf.mxu0
  %190 = vmatprep.mubr.bf16.mxu0 0
  %191 = vmatmul.mubr.bf16.gmra.mxu0 %v87
  %v192 = vpop.f32.mrf.mxu0
  %v193 = vadd.f32 %v52, %v192
  %v194 = vpop.f32.mrf.mxu0
  %v195 = vpop.f32.mrf.mxu0
  %v196 = vadd.f32 %v52, %v195
  %v197 = vpop.f32.mrf.mxu0
  %198 = vmatprep.mubr.bf16.mxu0 0
  %199 = vmatmul.mubr.bf16.gmra.mxu0 %v88
  %v200 = vpop.f32.mrf.mxu0
  %v201 = vadd.f32 %v52, %v200
  %v202 = vpop.f32.mrf.mxu0
  %v203 = vpop.f32.mrf.mxu0
  %v204 = vadd.f32 %v52, %v203
  %v205 = vpop.f32.mrf.mxu0
  %206 = vmatprep.mubr.bf16.mxu0 0
  %207 = vmatmul.mubr.bf16.gmra.mxu0 %v89
  %v208 = vpop.f32.mrf.mxu0
  %v209 = vadd.f32 %v52, %v208
  %v210 = vpop.f32.mrf.mxu0
  %v211 = vpop.f32.mrf.mxu0
  %v212 = vadd.f32 %v52, %v211
  %v213 = vpop.f32.mrf.mxu0
  %214 = vmatprep.mubr.bf16.mxu0 0
  %215 = vmatmul.mubr.bf16.gmra.mxu0 %v90
  %v216 = vpop.f32.mrf.mxu0
  %v217 = vadd.f32 %v52, %v216
  %v218 = vpop.f32.mrf.mxu0
  %v219 = vpop.f32.mrf.mxu0
  %v220 = vadd.f32 %v52, %v219
  %v221 = vpop.f32.mrf.mxu0
  %222 = vmatprep.mubr.bf16.mxu0 0
  %223 = vmatmul.mubr.bf16.gmra.mxu0 %v91
  %v224 = vpop.f32.mrf.mxu0
  %v225 = vadd.f32 %v52, %v224
  %v226 = vpop.f32.mrf.mxu0
  %v227 = vpop.f32.mrf.mxu0
  %v228 = vadd.f32 %v52, %v227
  %v229 = vpop.f32.mrf.mxu0
  %230 = vmatprep.mubr.bf16.mxu0 0
  %231 = vmatmul.mubr.bf16.gmra.mxu0 %v92
  %v232 = vpop.f32.mrf.mxu0
  %v233 = vadd.f32 %v52, %v232
  %v234 = vpop.f32.mrf.mxu0
  %v235 = vpop.f32.mrf.mxu0
  %v236 = vadd.f32 %v52, %v235
  %v237 = vpop.f32.mrf.mxu0
  %238 = vmatprep.mubr.bf16.mxu0 0
  %239 = vmatmul.mubr.bf16.gmra.mxu0 %v93
  %v240 = vpop.f32.mrf.mxu0
  %v241 = vadd.f32 %v52, %v240
  %v242 = vpop.f32.mrf.mxu0
  %v243 = vpop.f32.mrf.mxu0
  %v244 = vadd.f32 %v52, %v243
  %v245 = vpop.f32.mrf.mxu0
  %246 = vdwg.mxu0
  %v247 = vpack.c.bf16 %v188, %v185
  %v248 = vpack.c.bf16 %v196, %v193
  %v249 = vpack.c.bf16 %v204, %v201
  %v250 = vpack.c.bf16 %v212, %v209
  %v251 = vpack.c.bf16 %v220, %v217
  %v252 = vpack.c.bf16 %v228, %v225
  %v253 = vpack.c.bf16 %v236, %v233
  %v254 = vpack.c.bf16 %v244, %v241
  %v263 = vunpack.c.l.b16 %v247
  %v264 = vunpack.c.h.b16 %v247
  %v265 = vunpack.c.l.b16 %v248
  %v266 = vunpack.c.h.b16 %v248
  %v267 = vunpack.c.l.b16 %v249
  %v268 = vunpack.c.h.b16 %v249
  %v269 = vunpack.c.l.b16 %v250
  %v270 = vunpack.c.h.b16 %v250
  %v271 = vunpack.c.l.b16 %v251
  %v272 = vunpack.c.h.b16 %v251
  %v273 = vunpack.c.l.b16 %v252
  %v274 = vunpack.c.h.b16 %v252
  %v275 = vunpack.c.l.b16 %v253
  %v276 = vunpack.c.h.b16 %v253
  %v277 = vunpack.c.l.b16 %v254
  %v278 = vunpack.c.h.b16 %v254
  %v279 = vpack.c.b16 %v263, %v263
  %v280 = vpack.c.b16 %v264, %v264
  %v281 = vpack.c.b16 %v265, %v265
  %v282 = vpack.c.b16 %v266, %v266
  %v283 = vpack.c.b16 %v267, %v267
  %v284 = vpack.c.b16 %v268, %v268
  %v285 = vpack.c.b16 %v269, %v269
  %v286 = vpack.c.b16 %v270, %v270
  %v287 = vpack.c.b16 %v271, %v271
  %v288 = vpack.c.b16 %v272, %v272
  %v289 = vpack.c.b16 %v273, %v273
  %v290 = vpack.c.b16 %v274, %v274
  %v291 = vpack.c.b16 %v275, %v275
  %v292 = vpack.c.b16 %v276, %v276
  %v293 = vpack.c.b16 %v277, %v277
  %v294 = vpack.c.b16 %v278, %v278
  %311 = vst [vmem:[%s3] sm:$0xf] %v279
  %312 = vst [vmem:[%s3 + $0x4] sm:$0xf] %v280
  %313 = vst [vmem:[%s3 + $0x8] sm:$0xf] %v281
  %314 = vst [vmem:[%s3 + $0xc] sm:$0xf] %v282
  %315 = vst [vmem:[%s3 + $0x10] sm:$0xf] %v283
  %316 = vst [vmem:[%s3 + $0x14] sm:$0xf] %v284
  %317 = vst [vmem:[%s3 + $0x18] sm:$0xf] %v285
  %318 = vst [vmem:[%s3 + $0x1c] sm:$0xf] %v286
  %319 = vst [vmem:[%s3 + $0x20] sm:$0xf] %v287
  %320 = vst [vmem:[%s3 + $0x24] sm:$0xf] %v288
  %321 = vst [vmem:[%s3 + $0x28] sm:$0xf] %v289
  %322 = vst [vmem:[%s3 + $0x2c] sm:$0xf] %v290
  %323 = vst [vmem:[%s3 + $0x30] sm:$0xf] %v291
  %324 = vst [vmem:[%s3 + $0x34] sm:$0xf] %v292
  %325 = vst [vmem:[%s3 + $0x38] sm:$0xf] %v293
  %326 = vst [vmem:[%s3 + $0x3c] sm:$0xf] %v294
  // Predicated region
  $region14: #{primary_caps_forward.2} parent=0 // pred_check
    _
  $region15: #{primary_caps_forward.2} parent=0 // pred_check_branch
    %328 = sbr.rel (0) target = $region17
  $region16: #{primary_caps_forward.2} parent=0 // pred_region
    _
  $region17: #{primary_caps_forward.2} parent=0 // pred_fallthru
    _
  // Predicated region
  $region18: #{primary_caps_forward.2} parent=0 // pred_check
    _
  $region19: #{primary_caps_forward.2} parent=0 // pred_check_branch
    %330 = sbr.rel (0) target = $region21
  $region20: #{primary_caps_forward.2} parent=0 // pred_region
    _
  $region21: #{primary_caps_forward.2} parent=0 // pred_fallthru
    _

// kernel: primary_caps_forward.3
$region0: #{primary_caps_forward.3}
  #allocation0 [shape = 'u32[]', space=smem, size = 0x4, offset = 0x4, fixed_abs, tag = 'smem constant byte address 0x4 - core index']
  #allocation1 [shape = 'u32[144,128]{1,0:T(1,128)}', space=vmem, size = 0x12000, scoped, tag = 'internal scratch']
  %s0 = inlined_call_operand.vmem [shape: bf16[2,8,784], index: 0, kind: input, shape index: {}]
  %s1 = inlined_call_operand.hbm [shape: f32[2,8,784], index: 1, kind: output, shape index: {}]
  %s2 = sld [smem:[#allocation0]]
  $region37: #{primary_caps_forward.3} parent=0
    _
  %s4 = ssub.s32 1, %s2
  %s5 = scalar_select 0, %s4, %s2
  $region1: #{primary_caps_forward.3} parent=0
    #allocation2 [shape = 'u8[57344]{0}', space=vmem, size = 0xe000, scoped, tag = 'output window, operand 0']
    #allocation3 [shape = 's32[2]{0}', space=sflag, size = 0x8, scoped, tag = 'scoped memory for primary_caps_forward.3']
    %6 = vsyncpa [#allocation3], 0
    %s7 = scalar_lea.sflag [#allocation3], 1
    %8 = vsyncpa %s7, 0
    loop: start=0, step=1, limit=4
    $region2: #{primary_caps_forward.3} parent=1 // loop_pre_header
      _
    $region3: #{primary_caps_forward.3} parent=1 // loop_header
      %s10 = sphi 0, %s14
      %p11 = scmp.ge.s32.totalorder %s10, 4
      %s20 = sphi 0, %s22
      %s23 = sphi 0, %s20
      %s24 = sphi 0, %s23
      %s40 = sphi 0, %s24
      %s46 = sphi 0, %s48
      %s49 = sphi 0, %s46
      %s50 = sphi 0, %s49
      %s66 = sphi 0, %s50
    $region4: #{primary_caps_forward.3} parent=1 // loop_header_branch
      %13 = sbr.rel (%p11) target = $region8
    $region5: #{primary_caps_forward.3} parent=1 // loop_body
      %s15 = ssub.s32 %s10, 1
      %s16 = ssub.s32 %s10, 2
      %s17 = sadd.s32 %s10, 1
      %s18 = ssub.s32 %s10, %s17
      %p19 = scmp.eq.s32.totalorder %s18, 0
      %s21 = sadd.s32 %s20, 1
      %s22 = scalar_select %p19, %s20, %s21
      %p25 = pneg %p19
      %p26 = scmp.eq.s32.totalorder %s10, 1
      %p27 = por %p25, %p26
      %p28 = scmp.ne.s32.totalorder %s20, %s23
      %p29 = scmp.eq.s32.totalorder %s10, 0
      %p30 = por %p28, %p29
      %p31 = scmp.ne.s32.totalorder %s20, %s23
      %p32 = scmp.eq.s32.totalorder %s15, 1
      %p33 = por %p31, %p32
      %p34 = scmp.ne.s32.totalorder %s23, %s24
      %p35 = scmp.eq.s32.totalorder %s15, 0
      %p36 = por %p34, %p35
      %p37 = scmp.ne.s32.totalorder %s23, %s24
      %p38 = scmp.eq.s32.totalorder %s16, 1
      %p39 = por %p37, %p38
      %p41 = scmp.ne.s32.totalorder %s24, %s40
      %p42 = scmp.eq.s32.totalorder %s16, 0
      %p43 = por %p41, %p42
      %s44 = ssub.s32 %s10, %s17
      %p45 = scmp.eq.s32.totalorder %s44, 0
      %s47 = sadd.s32 %s46, 1
      %s48 = scalar_select %p45, %s46, %s47
      %p51 = pneg %p45
      %p52 = scmp.eq.s32.totalorder %s10, 1
      %p53 = por %p51, %p52
      %p54 = scmp.ne.s32.totalorder %s46, %s49
      %p55 = scmp.eq.s32.totalorder %s10, 0
      %p56 = por %p54, %p55
      %p57 = scmp.ne.s32.totalorder %s46, %s49
      %p58 = scmp.eq.s32.totalorder %s15, 1
      %p59 = por %p57, %p58
      %p60 = scmp.ne.s32.totalorder %s49, %s50
      %p61 = scmp.eq.s32.totalorder %s15, 0
      %p62 = por %p60, %p61
      %p63 = scmp.ne.s32.totalorder %s49, %s50
      %p64 = scmp.eq.s32.totalorder %s16, 1
      %p65 = por %p63, %p64
      %p67 = scmp.ne.s32.totalorder %s50, %s66
      %p68 = scmp.eq.s32.totalorder %s16, 0
      %p69 = por %p67, %p68
      %p70 = scmp.le.s32.totalorder 1, %s10
      %p71 = scmp.lt.s32.totalorder %s10, 3
      %p72 = pnand %p70, %p71
      %p73 = pneg %p72
      // Predicated region
      $region9: #{primary_caps_forward.3} parent=5 // pred_check
        _
      $region10: #{primary_caps_forward.3} parent=5 // pred_check_branch
        %75 = sbr.rel (%p72) target = $region12
      $region11: #{primary_caps_forward.3} parent=5 // pred_region
        %s76 = ssub.s32 %s10, 1
      $region12: #{primary_caps_forward.3} parent=5 // pred_fallthru
        _
      %p77 = scmp.lt.s32.totalorder %s10, 2
      // Predicated region
      $region13: #{primary_caps_forward.3} parent=5 // pred_check
        %p78 = pneg %p77
      $region14: #{primary_caps_forward.3} parent=5 // pred_check_branch
        %80 = sbr.rel (%p78) target = $region16
      $region15: #{primary_caps_forward.3} parent=5 // pred_region
        // Predicated region
        $region17: #{primary_caps_forward.3} parent=15 // pred_check
          %p81 = pneg %p30
        $region18: #{primary_caps_forward.3} parent=15 // pred_check_branch
          %83 = sbr.rel (%p81) target = $region20
        $region19: #{primary_caps_forward.3} parent=15 // pred_region
          %p84 = scmp.lt.s32.totalorder %s10, 1
          %s85 = scalar_select %p84, %s10, 1
          %s86 = smul.addr %s85, 7
          %s87 = smul.addr %s86, 4
          %s88 = scalar_lea.vmem %s0, %s87
        $region20: #{primary_caps_forward.3} parent=15 // pred_fallthru
          _
      $region16: #{primary_caps_forward.3} parent=5 // pred_fallthru
        _
      %p89 = scmp.le.s32.totalorder 1, %s10
      %p90 = scmp.lt.s32.totalorder %s10, 3
      %p91 = pnand %p89, %p90
      %p92 = pneg %p91
      // Predicated region
      $region21: #{primary_caps_forward.3} parent=5 // pred_check
        _
      $region22: #{primary_caps_forward.3} parent=5 // pred_check_branch
        %94 = sbr.rel (%p91) target = $region24
      $region23: #{primary_caps_forward.3} parent=5 // pred_region
        %s95 = ssub.s32 %s10, 1
        %p96 = scmp.lt.s32.totalorder %s15, 1
        %s97 = scalar_select %p96, %s15, 1
        %s98 = smul.addr %s97, 7
        %s99 = smul.addr %s98, 4
        %s100 = scalar_lea.vmem %s0, %s99
        %p101 = pneg %p36
        %p102 = pneg %p33
        %p103 = pneg %p62
        %p104 = pneg %p59
        %s105 = sand.u32 %s49, 1
        %s106 = scalar_lea.sflag [#allocation3], %s105
        %s107 = sand.u32 %s49, 1
        %s108 = smul.addr %s107, 56
        %s109 = scalar_lea.vmem [#allocation2], %s108
        %p110 = scmp.lt.s32.totalorder %s15, 1
        %s111 = scalar_select %p110, %s15, 1
        %s112 = smul.addr %s111, 7
        %s113 = smul.addr %s112, 4
        %s114 = scalar_lea.vmem %s0, %s113
        %v115 = vld [vmem:[%s114] sm:$0xff]
        %v116 = vld [vmem:[%s114 + $0x8] sm:$0xff]
        %v117 = vld [vmem:[%s114 + $0x10] sm:$0xff]
        %v118 = vld [vmem:[%s114 + $0x18] sm:$0xf]
        %v119 = vunpack.c.l.bf16 %v115
        %v120 = vunpack.c.h.bf16 %v115
        %v121 = vunpack.c.l.bf16 %v116
        %v122 = vunpack.c.h.bf16 %v116
        %v123 = vunpack.c.l.bf16 %v117
        %v124 = vunpack.c.h.bf16 %v117
        %v125 = vunpack.c.l.bf16 %v118
        %v126 = vmul.f32 %v119, %v119
        %v127 = vmul.f32 %v120, %v120
        %v128 = vmul.f32 %v121, %v121
        %v129 = vmul.f32 %v122, %v122
        %v130 = vmul.f32 %v123, %v123
        %v131 = vmul.f32 %v124, %v124
        %v132 = vmul.f32 %v125, %v125
        %v133 = vrot.slane %v126, 4
        %v134 = vadd.f32 %v126, %v133
        %v135 = vrot.slane %v134, 2
        %v136 = vadd.f32 %v134, %v135
        %v137 = vrot.slane %v136, 1
        %v138 = vadd.f32 %v136, %v137
        %v139 = vrot.slane %v127, 4
        %v140 = vadd.f32 %v127, %v139
        %v141 = vrot.slane %v140, 2
        %v142 = vadd.f32 %v140, %v141
        %v143 = vrot.slane %v142, 1
        %v144 = vadd.f32 %v142, %v143
        %v145 = vrot.slane %v128, 4
        %v146 = vadd.f32 %v128, %v145
        %v147 = vrot.slane %v146, 2
        %v148 = vadd.f32 %v146, %v147
        %v149 = vrot.slane %v148, 1
        %v150 = vadd.f32 %v148, %v149
        %v151 = vrot.slane %v129, 4
        %v152 = vadd.f32 %v129, %v151
        %v153 = vrot.slane %v152, 2
        %v154 = vadd.f32 %v152, %v153
        %v155 = vrot.slane %v154, 1
        %v156 = vadd.f32 %v154, %v155
        %v157 = vrot.slane %v130, 4
        %v158 = vadd.f32 %v130, %v157
        %v159 = vrot.slane %v158, 2
        %v160 = vadd.f32 %v158, %v159
        %v161 = vrot.slane %v160, 1
        %v162 = vadd.f32 %v160, %v161
        %v163 = vrot.slane %v131, 4
        %v164 = vadd.f32 %v131, %v163
        %v165 = vrot.slane %v164, 2
        %v166 = vadd.f32 %v164, %v165
        %v167 = vrot.slane %v166, 1
        %v168 = vadd.f32 %v166, %v167
        %vm169 = vcmask 130048
        %v170 = vsel %vm169, %v132, 0.0
        %v171 = vrot.slane %v170, 4
        %v172 = vadd.f32 %v170, %v171
        %v173 = vrot.slane %v172, 2
        %v174 = vadd.f32 %v172, %v173
        %v175 = vrot.slane %v174, 1
        %v176 = vadd.f32 %v174, %v175
        %v177 = vrsqrt.pop %v138
        %v178 = vmul.f32 %v138, %v177
        %vm179 = vcmp.eq.f32.partialorder %v138, inf
        %v180 = vsel %vm179, %v138, %v178
        %vm181 = vcmp.eq.f32.partialorder %v138, 0.0
        %v182 = vand.u32 %v138, 2147483648
        %v183 = vsel %vm181, %v182, %v180
        %v184 = vrsqrt.pop %v144
        %v185 = vmul.f32 %v144, %v184
        %vm186 = vcmp.eq.f32.partialorder %v144, inf
        %v187 = vsel %vm186, %v144, %v185
        %vm188 = vcmp.eq.f32.partialorder %v144, 0.0
        %v189 = vand.u32 %v144, 2147483648
        %v190 = vsel %vm188, %v189, %v187
        %v191 = vrsqrt.pop %v150
        %v192 = vmul.f32 %v150, %v191
        %vm193 = vcmp.eq.f32.partialorder %v150, inf
        %v194 = vsel %vm193, %v150, %v192
        %vm195 = vcmp.eq.f32.partialorder %v150, 0.0
        %v196 = vand.u32 %v150, 2147483648
        %v197 = vsel %vm195, %v196, %v194
        %v198 = vrsqrt.pop %v156
        %v199 = vmul.f32 %v156, %v198
        %vm200 = vcmp.eq.f32.partialorder %v156, inf
        %v201 = vsel %vm200, %v156, %v199
        %vm202 = vcmp.eq.f32.partialorder %v156, 0.0
        %v203 = vand.u32 %v156, 2147483648
        %v204 = vsel %vm202, %v203, %v201
        %v205 = vrsqrt.pop %v162
        %v206 = vmul.f32 %v162, %v205
        %vm207 = vcmp.eq.f32.partialorder %v162, inf
        %v208 = vsel %vm207, %v162, %v206
        %vm209 = vcmp.eq.f32.partialorder %v162, 0.0
        %v210 = vand.u32 %v162, 2147483648
        %v211 = vsel %vm209, %v210, %v208
        %v212 = vrsqrt.pop %v168
        %v213 = vmul.f32 %v168, %v212
        %vm214 = vcmp.eq.f32.partialorder %v168, inf
        %v215 = vsel %vm214, %v168, %v213
        %vm216 = vcmp.eq.f32.partialorder %v168, 0.0
        %v217 = vand.u32 %v168, 2147483648
        %v218 = vsel %vm216, %v217, %v215
        %v219 = vrsqrt.pop %v176
        %v220 = vmul.f32 %v176, %v219
        %vm221 = vcmp.eq.f32.partialorder %v176, inf
        %v222 = vsel %vm221, %v176, %v220
        %vm223 = vcmp.eq.f32.partialorder %v176, 0.0
        %v224 = vand.u32 %v176, 2147483648
        %v225 = vsel %vm223, %v224, %v222
        %v226 = vadd.f32 %v138, 1.0
        %v227 = vadd.f32 %v144, 1.0
        %v228 = vadd.f32 %v150, 1.0
        %v229 = vadd.f32 %v156, 1.0
        %v230 = vadd.f32 %v162, 1.0
        %v231 = vadd.f32 %v168, 1.0
        %v232 = vadd.f32 %v176, 1.0
        %v233 = vrcp.pop %v226
        %v234 = vrcp.pop %v227
        %v235 = vrcp.pop %v228
        %v236 = vrcp.pop %v229
        %v237 = vrcp.pop %v230
        %v238 = vrcp.pop %v231
        %v239 = vrcp.pop %v232
        %v240 = vmul.f32 %v183, %v233
        %v241 = vmul.f32 %v190, %v234
        %v242 = vmul.f32 %v197, %v235
        %v243 = vmul.f32 %v204, %v236
        %v244 = vmul.f32 %v211, %v237
        %v245 = vmul.f32 %v218, %v238
        %v246 = vmul.f32 %v225, %v239
        %v247 = vmul.f32 %v119, %v240
        %v248 = vmul.f32 %v120, %v241
        %v249 = vmul.f32 %v121, %v242
        %v250 = vmul.f32 %v122, %v243
        %v251 = vmul.f32 %v123, %v244
        %v252 = vmul.f32 %v124, %v245
        %v253 = vmul.f32 %v125, %v246
        %254 = vst [vmem:[%s109] sm:$0xff] %v247
        %255 = vst [vmem:[%s109 + $0x8] sm:$0xff] %v248
        %256 = vst [vmem:[%s109 + $0x10] sm:$0xff] %v249
        %257 = vst [vmem:[%s109 + $0x18] sm:$0xff] %v250
        %258 = vst [vmem:[%s109 + $0x20] sm:$0xff] %v251
        %259 = vst [vmem:[%s109 + $0x28] sm:$0xff] %v252
        %260 = vst.msk [vmem:[%s109 + $0x30] sm:$0xff] %vm169, %v253
        %s261 = sand.u32 %s49, 1
        %s262 = scalar_lea.sflag [#allocation3], %s261
        %s263 = sand.u32 %s49, 1
        %s264 = smul.addr %s263, 56
        %s265 = scalar_lea.vmem [#allocation2], %s264
        // Predicated region
        $region25: #{primary_caps_forward.3} parent=23 // pred_check
          %p266 = pneg %p59
        $region26: #{primary_caps_forward.3} parent=23 // pred_check_branch
          %268 = sbr.rel (%p266) target = $region28
        $region27: #{primary_caps_forward.3} parent=23 // pred_region
          %s270 = ssub.s32 896, 896
          %271 = vsyncadd %s262, %s270
          %s272 = smul.addr %s15, 7
          %s273 = smul.addr %s272, 128
          %s274 = scalar_lea.hbm %s1, %s273
          %s276 = sshll.u32 %s265, 4
          %s277 = int_to_ptr.vmem [resolvable:$true] %s276
          %279 = dma.vmem_to_hbm [thread:$0]  %s277, 896, %s274, %s262
        $region28: #{primary_caps_forward.3} parent=23 // pred_fallthru
          _
      $region24: #{primary_caps_forward.3} parent=5 // pred_fallthru
        _
      %p280 = scmp.le.s32.totalorder 2, %s10
      // Predicated region
      $region29: #{primary_caps_forward.3} parent=5 // pred_check
        %p281 = pneg %p280
      $region30: #{primary_caps_forward.3} parent=5 // pred_check_branch
        %283 = sbr.rel (%p281) target = $region32
      $region31: #{primary_caps_forward.3} parent=5 // pred_region
        %s284 = ssub.s32 %s10, 2
        // Predicated region
        $region33: #{primary_caps_forward.3} parent=31 // pred_check
          %p285 = pneg %p65
        $region34: #{primary_caps_forward.3} parent=31 // pred_check_branch
          %287 = sbr.rel (%p285) target = $region36
        $region35: #{primary_caps_forward.3} parent=31 // pred_region
          %s288 = sand.u32 %s50, 1
          %s289 = scalar_lea.sflag [#allocation3], %s288
          %s290 = sand.u32 %s50, 1
          %s291 = smul.addr %s290, 56
          %s292 = scalar_lea.vmem [#allocation2], %s291
          %293 = dma.done %s289, 896
        $region36: #{primary_caps_forward.3} parent=31 // pred_fallthru
          _
      $region32: #{primary_caps_forward.3} parent=5 // pred_fallthru
        _
    $region6: #{primary_caps_forward.3} parent=1 // loop_footer
      %s14 = sadd.s32 1, %s10
    $region7: #{primary_caps_forward.3} parent=1 // loop_footer_branch
      %9 = sbr.rel target = $region3
    $region8: #{primary_caps_forward.3} parent=1 // loop_exit
      _
    %294 = vsyncpa [#allocation3], 1
    %s295 = scalar_lea.sflag [#allocation3], 1
    %296 = vsyncpa %s295, 1

</llo_original>
